<compile_context>
chip_gen: v7x
topology: tpu7x:2x2x1
jax: 0.10.0
libtpu: 0.0.40
codegen_flags: <defaults>
</compile_context>

<pallas_src>
import functools
import math

import jax
import jax.numpy as jnp
from jax import lax
from jax.experimental import pallas as pl
from jax.experimental.pallas import tpu as pltpu


# ---------------------------------------------------------------------------
# Kernel 1: fused QKV projection, head-tiled.
#   grid = (B, S/ts, H); per step: x(ts, D) @ Wqkv_h(D, 3*hd) -> q_h, k_h, v_h.
# ---------------------------------------------------------------------------
def qkv_proj_kernel(x_ref, w_ref, q_ref, k_ref, v_ref, *, head_dim):
    x = x_ref[0]                                        # (ts, D) bf16
    w = w_ref[0]                                        # (D, 3*hd) bf16 (Q cols pre-scaled)
    qkv = jnp.dot(x, w, preferred_element_type=jnp.float32)     # (ts, 3*hd) f32 acc
    hd = head_dim
    q_ref[0, 0] = qkv[:, 0 * hd:1 * hd].astype(q_ref.dtype)
    k_ref[0, 0] = qkv[:, 1 * hd:2 * hd].astype(k_ref.dtype)
    v_ref[0, 0] = qkv[:, 2 * hd:3 * hd].astype(v_ref.dtype)


# ---------------------------------------------------------------------------
# Kernel 2: flash-style attention (online softmax over KV tiles) + fused fc_out.
#   grid = (B, S/tq, H, S/tk); KV reduction innermost, head accumulation next.
# ---------------------------------------------------------------------------
def attention_kernel(q_ref, k_ref, v_ref, wout_ref, bout_ref, o_ref,
                     m_s, l_s, acc_s, oacc_s):
    h = pl.program_id(2)
    kv = pl.program_id(3)
    nh = pl.num_programs(2)
    nk = pl.num_programs(3)

    @pl.when(kv == 0)
    def _init_head_state():
        m_s[...] = jnp.full(m_s.shape, -jnp.inf, jnp.float32)
        l_s[...] = jnp.zeros(l_s.shape, jnp.float32)
        acc_s[...] = jnp.zeros(acc_s.shape, jnp.float32)

    @pl.when(jnp.logical_and(kv == 0, h == 0))
    def _init_output_acc():
        oacc_s[...] = jnp.zeros(oacc_s.shape, jnp.float32)

    q = q_ref[0, 0]                                     # (tq, hd) bf16 (pre-scaled)
    k = k_ref[0, 0]                                     # (tk, hd) bf16
    v = v_ref[0, 0]                                     # (tk, hd) bf16

    # scores = q @ k^T expressed as a contraction (no materialized transpose).
    s = lax.dot_general(q, k, dimension_numbers=(((1,), (1,)), ((), ())),
                        preferred_element_type=jnp.float32)        # (tq, tk) f32

    m_prev = m_s[...]                                   # (tq, 1)
    m_new = jnp.maximum(m_prev, jnp.max(s, axis=-1, keepdims=True))
    alpha = jnp.exp(m_prev - m_new)                     # (tq, 1) f32
    # TODO(synk): on v6e/v7x (bf16 EUP) p could be computed in bf16 to unload
    #             the EUP slot; kept f32 here for accuracy (required on v5e).
    p = jnp.exp(s - m_new)                              # (tq, tk) f32
    l_s[...] = alpha * l_s[...] + jnp.sum(p, axis=-1, keepdims=True)
    acc_s[...] = alpha * acc_s[...] + jnp.dot(
        p.astype(v.dtype), v, preferred_element_type=jnp.float32)  # (tq, hd)
    m_s[...] = m_new

    @pl.when(kv == nk - 1)
    def _fold_head_into_output():
        inv_l = pl.reciprocal(l_s[...], approx=True)                # EUP slot
        attended = (acc_s[...] * inv_l).astype(wout_ref.dtype)      # (tq, hd) bf16
        # fc_out contribution of this head: attended_h @ Wout^T[h-rows, :]
        oacc_s[...] += jnp.dot(attended, wout_ref[0],
                               preferred_element_type=jnp.float32)  # (tq, D) f32

    @pl.when(jnp.logical_and(kv == nk - 1, h == nh - 1))
    def _finalize():
        o_ref[0] = (oacc_s[...] + bout_ref[...]).astype(o_ref.dtype)


# ---------------------------------------------------------------------------
# Host-side helpers
# ---------------------------------------------------------------------------
def _default_vmem_limit_bytes():
    """Per-generation scoped-VMEM budget (v7x: 64 MiB physical vs 128 MiB on v5e/v6e)."""
    try:
        cap = getattr(pltpu.get_tpu_info(), "vmem_capacity_bytes", None)
        if cap:
            return int(cap * 0.8)
    except Exception:
        pass
    return 48 * 1024 * 1024   # conservative fallback, safe on all generations


def _pick_tile(length, cap, override=None):
    if override is not None:
        assert length % override == 0, "length must be divisible by the tile size"
        return override
    if length <= cap:
        return length
    for cand in (cap, 512, 256, 128, 64, 32, 16, 8):
        if cand <= cap and length % cand == 0:
            return cand
    raise ValueError(f"no supported tile <= {cap} divides sequence length {length}")


# ---------------------------------------------------------------------------
# Wrapper
# ---------------------------------------------------------------------------
def multi_headed_self_attention(x, w_qkv, w_out, b_out, *, num_heads,
                                seq_tile=None, q_tile=None, kv_tile=None,
                                out_dtype=None):
    """x: (B, S, D) f32; w_qkv: (3D, D); w_out: (D, D); b_out: (D,).

    Returns (B, S, D) in `out_dtype` (default x.dtype; pass jnp.bfloat16 on
    bandwidth-starved chips like v5e if the consumer accepts it).
    """
    B, S, D = x.shape
    assert D % num_heads == 0, "model_dim must be divisible by num_heads"
    head_dim = D // num_heads
    out_dtype = x.dtype if out_dtype is None else out_dtype

    # Bigger tiles fill the 256-wide MXU (v6e/v7x) and cut K/V HBM re-reads.
    ts = _pick_tile(S, 512, seq_tile)
    tq = _pick_tile(S, 256, q_tile)
    tk = _pick_tile(S, 256, kv_tile)
    vmem_limit = _default_vmem_limit_bytes()

    # --- host-side layout / dtype plumbing (runs once, outside the kernels) ---
    scale = 1.0 / math.sqrt(head_dim)
    w_t = jnp.transpose(w_qkv)                           # (D_in, 3D), in-features on sublanes
    w_t = w_t.at[:, :D].multiply(scale)                  # fold softmax scale into Wq
    # Reorder columns head-major: (D_in, 3, H, hd) -> (H, D_in, 3*hd)
    w_head = (w_t.reshape(D, 3, num_heads, head_dim)
                 .transpose(2, 0, 1, 3)
                 .reshape(num_heads, D, 3 * head_dim)
                 .astype(jnp.bfloat16))
    # Wout^T split by head rows: (H, hd, D_out)
    w_out_h = (jnp.transpose(w_out)
                  .reshape(num_heads, head_dim, D)
                  .astype(jnp.bfloat16))
    b_out2d = b_out.reshape(1, D).astype(jnp.float32)
    x_bf = x.astype(jnp.bfloat16)
    compute_dtype = jnp.bfloat16

    # --- kernel 1: fused, head-tiled QKV projection -> (B, H, S, hd) each ---
    qkv_kernel = functools.partial(qkv_proj_kernel, head_dim=head_dim)
    q, k, v = pl.pallas_call(
        qkv_kernel,
        out_shape=tuple(jax.ShapeDtypeStruct((B, num_heads, S, head_dim), compute_dtype)
                        for _ in range(3)),
        grid_spec=pltpu.PrefetchScalarGridSpec(
            num_scalar_prefetch=0,
            grid=(B, S // ts, num_heads),
            in_specs=[
                # x block index is constant across the head axis -> DMA elided.
                pl.BlockSpec((1, ts, D), lambda b, si, h: (b, si, 0)),
                pl.BlockSpec((1, D, 3 * head_dim), lambda b, si, h: (h, 0, 0)),
            ],
            out_specs=[pl.BlockSpec((1, 1, ts, head_dim),
                                    lambda b, si, h: (b, h, si, 0))
                       for _ in range(3)],
        ),
        compiler_params=pltpu.CompilerParams(
            dimension_semantics=("parallel", "parallel", "parallel"),
            vmem_limit_bytes=vmem_limit),
    )(x_bf, w_head)

    # --- kernel 2: flash attention + fused output projection ---
    out = pl.pallas_call(
        attention_kernel,
        out_shape=jax.ShapeDtypeStruct((B, S, D), out_dtype),
        grid_spec=pltpu.PrefetchScalarGridSpec(
            num_scalar_prefetch=0,
            grid=(B, S // tq, num_heads, S // tk),       # KV (reduction) axis last
            in_specs=[
                pl.BlockSpec((1, 1, tq, head_dim), lambda b, qi, h, kv: (b, h, qi, 0)),
                pl.BlockSpec((1, 1, tk, head_dim), lambda b, qi, h, kv: (b, h, kv, 0)),
                pl.BlockSpec((1, 1, tk, head_dim), lambda b, qi, h, kv: (b, h, kv, 0)),
                pl.BlockSpec((1, head_dim, D), lambda b, qi, h, kv: (h, 0, 0)),   # Wout rows
                pl.BlockSpec((1, D), lambda b, qi, h, kv: (0, 0)),                # bias
            ],
            out_specs=pl.BlockSpec((1, tq, D), lambda b, qi, h, kv: (b, qi, 0)),
            scratch_shapes=[
                pltpu.VMEM((tq, 1), jnp.float32),            # running max m
                pltpu.VMEM((tq, 1), jnp.float32),            # running sum l
                pltpu.VMEM((tq, head_dim), jnp.float32),     # per-head attention acc
                pltpu.VMEM((tq, D), jnp.float32),            # fc_out accumulator
            ],
        ),
        compiler_params=pltpu.CompilerParams(
            dimension_semantics=("parallel", "parallel", "arbitrary", "arbitrary"),
            vmem_limit_bytes=vmem_limit),
    )(q, k, v, w_out_h, b_out2d)
    return out


# ---------------------------------------------------------------------------
# Pure-JAX reference (mirrors the PyTorch forward, all f32).
# ---------------------------------------------------------------------------
def mhsa_reference(x, w_qkv, w_out, b_out, *, num_heads):
    B, S, D = x.shape
    hd = D // num_heads
    qkv = x @ w_qkv.T                                                  # (B, S, 3D)
    q, k, v = jnp.split(qkv, 3, axis=-1)

    def heads(t):
        return t.reshape(B, S, num_heads, hd).transpose(0, 2, 1, 3)   # (B, H, S, hd)

    q, k, v = heads(q), heads(k), heads(v)
    scores = (q @ jnp.swapaxes(k, -2, -1)) / jnp.sqrt(jnp.float32(hd))
    w = jax.nn.softmax(scores, axis=-1)
    att = (w @ v).transpose(0, 2, 1, 3).reshape(B, S, D)
    return att @ w_out.T + b_out


if __name__ == "__main__":
    def run_case(B, S, D, H, key):
        kx, kw1, kw2, kb = jax.random.split(key, 4)
        x = jax.random.normal(kx, (B, S, D), dtype=jnp.float32)
        # nn.Linear-style weights: (out_features, in_features).
        w_qkv = jax.random.normal(kw1, (3 * D, D), dtype=jnp.float32) * 0.1
        w_out = jax.random.normal(kw2, (D, D), dtype=jnp.float32) * 0.1
        b_out = jax.random.normal(kb, (D,), dtype=jnp.float32) * 0.1

        out = multi_headed_self_attention(x, w_qkv, w_out, b_out, num_heads=H)
        out = jax.block_until_ready(out)
        ref = mhsa_reference(x, w_qkv, w_out, b_out, num_heads=H)
        assert out.shape == (B, S, D)
        # bf16 MXU inputs (f32 accumulation) + approx reciprocal -> normalized check.
        err = float(jnp.max(jnp.abs(out - ref)) / (jnp.max(jnp.abs(ref)) + 1e-6))
        assert err < 3e-2, f"mismatch vs reference: rel-max-err={err}"

    key = jax.random.PRNGKey(0)
    k_small, k_med = jax.random.split(key)
    # Small shapes consistent with the module (model_dim divisible by num_heads).
    run_case(2, 8, 32, 4, k_small)
    # Medium shapes: exercises multi-tile grid (q/kv/head axes) and lane alignment.
    run_case(2, 512, 256, 4, k_med)

    print("KERNEL_OK")
</pallas_src>

<mosaic_0001>
module attributes {stable_mosaic.version = 11 : i64} {
  func.func @qkv_proj_kernel(%arg0: i32, %arg1: i32, %arg2: i32, %arg3: memref<1x8x32xbf16, #tpu.memory_space<vmem>>, %arg4: memref<1x32x24xbf16, #tpu.memory_space<vmem>>, %arg5: memref<1x1x8x8xbf16, #tpu.memory_space<vmem>>, %arg6: memref<1x1x8x8xbf16, #tpu.memory_space<vmem>>, %arg7: memref<1x1x8x8xbf16, #tpu.memory_space<vmem>>) attributes {dimension_semantics = [#tpu.dimension_semantics<parallel>, #tpu.dimension_semantics<parallel>, #tpu.dimension_semantics<parallel>], iteration_bounds = array<i64: 2, 1, 4>, scalar_prefetch = 0 : i64, scratch_operands = 0 : i64, tpu.core_type = #tpu.core_type<tc>, window_params = [{transform_indices = @transform_0, window_bounds = array<i64: 1, 8, 32>}, {transform_indices = @transform_1, window_bounds = array<i64: 1, 32, 24>}, {transform_indices = @transform_2, window_bounds = array<i64: 1, 1, 8, 8>}, {transform_indices = @transform_3, window_bounds = array<i64: 1, 1, 8, 8>}, {transform_indices = @transform_4, window_bounds = array<i64: 1, 1, 8, 8>}]} {
    %c0 = arith.constant 0 : index
    %c0_0 = arith.constant 0 : index
    %c0_1 = arith.constant 0 : index
    %0 = vector.load %arg3[%c0, %c0_0, %c0_1] : memref<1x8x32xbf16, #tpu.memory_space<vmem>>, vector<1x8x32xbf16>
    %1 = vector.shape_cast %0 : vector<1x8x32xbf16> to vector<8x32xbf16>
    %c0_2 = arith.constant 0 : index
    %c0_3 = arith.constant 0 : index
    %c0_4 = arith.constant 0 : index
    %2 = vector.load %arg4[%c0_2, %c0_3, %c0_4] : memref<1x32x24xbf16, #tpu.memory_space<vmem>>, vector<1x32x24xbf16>
    %3 = vector.shape_cast %2 : vector<1x32x24xbf16> to vector<32x24xbf16>
    %cst = arith.constant dense<0.000000e+00> : vector<8x24xf32>
    %4 = tpu.matmul %1, %3, %cst {dimension_numbers = #tpu.dot_dimension_numbers<[1], [0], [0], [1], [0, 0, 1, 1], [], []>} : vector<8x32xbf16>, vector<32x24xbf16>, vector<8x24xf32> -> vector<8x24xf32>
    %5 = vector.extract_strided_slice %4 {offsets = [0, 0], sizes = [8, 8], strides = [1, 1]} : vector<8x24xf32> to vector<8x8xf32>
    %6 = arith.truncf %5 : vector<8x8xf32> to vector<8x8xbf16>
    %c0_5 = arith.constant 0 : index
    %c0_6 = arith.constant 0 : index
    %c0_7 = arith.constant 0 : index
    %c0_8 = arith.constant 0 : index
    %7 = vector.load %arg5[%c0_5, %c0_6, %c0_7, %c0_8] : memref<1x1x8x8xbf16, #tpu.memory_space<vmem>>, vector<1x1x8x8xbf16>
    %8 = vector.shape_cast %7 : vector<1x1x8x8xbf16> to vector<8x8xbf16>
    %9 = vector.shape_cast %6 : vector<8x8xbf16> to vector<1x1x8x8xbf16>
    tpu.vector_store %arg5[%c0_5, %c0_6, %c0_7, %c0_8], %9 {strides = array<i32>} : memref<1x1x8x8xbf16, #tpu.memory_space<vmem>>, vector<1x1x8x8xbf16>,
    %10 = vector.extract_strided_slice %4 {offsets = [0, 8], sizes = [8, 8], strides = [1, 1]} : vector<8x24xf32> to vector<8x8xf32>
    %11 = arith.truncf %10 : vector<8x8xf32> to vector<8x8xbf16>
    %c0_9 = arith.constant 0 : index
    %c0_10 = arith.constant 0 : index
    %c0_11 = arith.constant 0 : index
    %c0_12 = arith.constant 0 : index
    %12 = vector.load %arg6[%c0_9, %c0_10, %c0_11, %c0_12] : memref<1x1x8x8xbf16, #tpu.memory_space<vmem>>, vector<1x1x8x8xbf16>
    %13 = vector.shape_cast %12 : vector<1x1x8x8xbf16> to vector<8x8xbf16>
    %14 = vector.shape_cast %11 : vector<8x8xbf16> to vector<1x1x8x8xbf16>
    tpu.vector_store %arg6[%c0_9, %c0_10, %c0_11, %c0_12], %14 {strides = array<i32>} : memref<1x1x8x8xbf16, #tpu.memory_space<vmem>>, vector<1x1x8x8xbf16>,
    %15 = vector.extract_strided_slice %4 {offsets = [0, 16], sizes = [8, 8], strides = [1, 1]} : vector<8x24xf32> to vector<8x8xf32>
    %16 = arith.truncf %15 : vector<8x8xf32> to vector<8x8xbf16>
    %c0_13 = arith.constant 0 : index
    %c0_14 = arith.constant 0 : index
    %c0_15 = arith.constant 0 : index
    %c0_16 = arith.constant 0 : index
    %17 = vector.load %arg7[%c0_13, %c0_14, %c0_15, %c0_16] : memref<1x1x8x8xbf16, #tpu.memory_space<vmem>>, vector<1x1x8x8xbf16>
    %18 = vector.shape_cast %17 : vector<1x1x8x8xbf16> to vector<8x8xbf16>
    %19 = vector.shape_cast %16 : vector<8x8xbf16> to vector<1x1x8x8xbf16>
    tpu.vector_store %arg7[%c0_13, %c0_14, %c0_15, %c0_16], %19 {strides = array<i32>} : memref<1x1x8x8xbf16, #tpu.memory_space<vmem>>, vector<1x1x8x8xbf16>,
    return
  }
  func.func @transform_0(%arg0: i32, %arg1: i32, %arg2: i32) -> (i32, i32, i32) {
    %c0_i32 = arith.constant 0 : i32
    %c0_i32_0 = arith.constant 0 : i32
    return %arg0, %arg1, %c0_i32 : i32, i32, i32
  }
  func.func @transform_1(%arg0: i32, %arg1: i32, %arg2: i32) -> (i32, i32, i32) {
    %c0_i32 = arith.constant 0 : i32
    %c0_i32_0 = arith.constant 0 : i32
    %c0_i32_1 = arith.constant 0 : i32
    return %arg2, %c0_i32, %c0_i32_0 : i32, i32, i32
  }
  func.func @transform_2(%arg0: i32, %arg1: i32, %arg2: i32) -> (i32, i32, i32, i32) {
    %c0_i32 = arith.constant 0 : i32
    %c0_i32_0 = arith.constant 0 : i32
    return %arg0, %arg2, %arg1, %c0_i32 : i32, i32, i32, i32
  }
  func.func @transform_3(%arg0: i32, %arg1: i32, %arg2: i32) -> (i32, i32, i32, i32) {
    %c0_i32 = arith.constant 0 : i32
    %c0_i32_0 = arith.constant 0 : i32
    return %arg0, %arg2, %arg1, %c0_i32 : i32, i32, i32, i32
  }
  func.func @transform_4(%arg0: i32, %arg1: i32, %arg2: i32) -> (i32, i32, i32, i32) {
    %c0_i32 = arith.constant 0 : i32
    %c0_i32_0 = arith.constant 0 : i32
    return %arg0, %arg2, %arg1, %c0_i32 : i32, i32, i32, i32
  }
}

</mosaic_0001>

<llo_original>
// kernel: tpu_custom_call.1
$region0: #{tpu_custom_call.1}
  #allocation0 [shape = 'u32[]', space=smem, size = 0x4, offset = 0x4, fixed_abs, tag = 'smem constant byte address 0x4 - core index']
  #allocation1 [shape = 'u32[144,128]{1,0:T(1,128)}', space=vmem, size = 0x12000, scoped, tag = 'internal scratch']
  %s0 = inlined_call_operand.vmem [shape: bf16[2,8,32], index: 0, kind: input, shape index: {}]
  %s1 = inlined_call_operand.vmem [shape: bf16[4,32,24], index: 1, kind: input, shape index: {}]
  %s2 = inlined_call_operand.hbm [shape: bf16[2,4,8,8], index: 2, kind: output, shape index: {0}]
  %s3 = inlined_call_operand.hbm [shape: bf16[2,4,8,8], index: 3, kind: output, shape index: {1}]
  %s4 = inlined_call_operand.hbm [shape: bf16[2,4,8,8], index: 4, kind: output, shape index: {2}]
  %5 = xla_tuple %s2, %s3, %s4
  %s6 = sld [smem:[#allocation0]]
  $region57: #{tpu_custom_call.1} parent=0
    _
  %s8 = ssub.s32 1, %s6
  %s9 = scalar_select 0, %s8, %s6
  $region1: #{tpu_custom_call.1} parent=0
    #allocation2 [shape = 'u8[4096]{0}', space=vmem, size = 0x1000, scoped, tag = 'output window, operand 0']
    #allocation3 [shape = 's32[2]{0}', space=sflag, size = 0x8, scoped, tag = 'scoped memory for tpu_custom_call.1']
    #allocation4 [shape = 'u8[4096]{0}', space=vmem, size = 0x1000, scoped, tag = 'output window, operand 1']
    #allocation5 [shape = 's32[2]{0}', space=sflag, size = 0x8, scoped, tag = 'scoped memory for tpu_custom_call.1']
    #allocation6 [shape = 'u8[4096]{0}', space=vmem, size = 0x1000, scoped, tag = 'output window, operand 2']
    %10 = vsyncpa [#allocation3], 0
    %s11 = scalar_lea.sflag [#allocation3], 1
    %12 = vsyncpa %s11, 0
    %13 = vsyncpa [#allocation5], 0
    %s14 = scalar_lea.sflag [#allocation5], 1
    %15 = vsyncpa %s14, 0
    loop: start=0, step=1, limit=10
    $region2: #{tpu_custom_call.1} parent=1 // loop_pre_header
      _
    $region3: #{tpu_custom_call.1} parent=1 // loop_header
      %s17 = sphi 0, %s21
      %p18 = scmp.ge.s32.totalorder %s17, 10
      %s24 = sphi 0, %s43
      %s25 = sphi 0, %s39
      %s26 = sphi 0, %s35
      %s27 = sphi 0, %s24
      %s28 = sphi 0, %s25
      %s29 = sphi 0, %s26
      %s30 = sphi 0, %s27
      %s31 = sphi 0, %s28
      %s32 = sphi 0, %s29
      %s48 = sphi 0, %s50
      %s51 = sphi 0, %s48
      %s52 = sphi 0, %s51
      %s68 = sphi 0, %s52
      %s74 = sphi 0, %s76
      %s77 = sphi 0, %s74
      %s78 = sphi 0, %s77
      %s94 = sphi 0, %s78
      %s104 = sphi 0, %s106
      %s107 = sphi 0, %s104
      %s108 = sphi 0, %s107
      %s124 = sphi 0, %s108
      %s134 = sphi 0, %s136
      %s137 = sphi 0, %s134
      %s138 = sphi 0, %s137
      %s154 = sphi 0, %s138
      %s164 = sphi 0, %s166
      %s167 = sphi 0, %s164
      %s168 = sphi 0, %s167
      %s184 = sphi 0, %s168
    $region4: #{tpu_custom_call.1} parent=1 // loop_header_branch
      %20 = sbr.rel (%p18) target = $region8
    $region5: #{tpu_custom_call.1} parent=1 // loop_body
      %s22 = ssub.s32 %s17, 1
      %s23 = ssub.s32 %s17, 2
      %s33 = sadd.s32 1, %s26
      %p34 = scmp.ge.s32.totalorder %s33, 4
      %s35 = scalar_select %p34, 0, %s33
      %s36 = sadd.s32 1, %s25
      %s37 = scalar_select %p34, %s36, %s25
      %p38 = scmp.ge.s32.totalorder %s37, 1
      %s39 = scalar_select %p38, 0, %s37
      %s40 = sadd.s32 1, %s24
      %s41 = scalar_select %p38, %s40, %s24
      %p42 = scmp.ge.s32.totalorder %s41, 2
      %s43 = scalar_select %p42, 0, %s41
      %s44 = ssub.s32 %s24, %s43
      %s45 = ssub.s32 %s25, %s39
      %s46 = sor.u32 %s44, %s45
      %p47 = scmp.eq.s32.totalorder %s46, 0
      %s49 = sadd.s32 %s48, 1
      %s50 = scalar_select %p47, %s48, %s49
      %p53 = pneg %p47
      %p54 = scmp.eq.s32.totalorder %s17, 7
      %p55 = por %p53, %p54
      %p56 = scmp.ne.s32.totalorder %s48, %s51
      %p57 = scmp.eq.s32.totalorder %s17, 0
      %p58 = por %p56, %p57
      %p59 = scmp.ne.s32.totalorder %s48, %s51
      %p60 = scmp.eq.s32.totalorder %s22, 7
      %p61 = por %p59, %p60
      %p62 = scmp.ne.s32.totalorder %s51, %s52
      %p63 = scmp.eq.s32.totalorder %s22, 0
      %p64 = por %p62, %p63
      %p65 = scmp.ne.s32.totalorder %s51, %s52
      %p66 = scmp.eq.s32.totalorder %s23, 7
      %p67 = por %p65, %p66
      %p69 = scmp.ne.s32.totalorder %s52, %s68
      %p70 = scmp.eq.s32.totalorder %s23, 0
      %p71 = por %p69, %p70
      %s72 = ssub.s32 %s26, %s35
      %p73 = scmp.eq.s32.totalorder %s72, 0
      %s75 = sadd.s32 %s74, 1
      %s76 = scalar_select %p73, %s74, %s75
      %p79 = pneg %p73
      %p80 = scmp.eq.s32.totalorder %s17, 7
      %p81 = por %p79, %p80
      %p82 = scmp.ne.s32.totalorder %s74, %s77
      %p83 = scmp.eq.s32.totalorder %s17, 0
      %p84 = por %p82, %p83
      %p85 = scmp.ne.s32.totalorder %s74, %s77
      %p86 = scmp.eq.s32.totalorder %s22, 7
      %p87 = por %p85, %p86
      %p88 = scmp.ne.s32.totalorder %s77, %s78
      %p89 = scmp.eq.s32.totalorder %s22, 0
      %p90 = por %p88, %p89
      %p91 = scmp.ne.s32.totalorder %s77, %s78
      %p92 = scmp.eq.s32.totalorder %s23, 7
      %p93 = por %p91, %p92
      %p95 = scmp.ne.s32.totalorder %s78, %s94
      %p96 = scmp.eq.s32.totalorder %s23, 0
      %p97 = por %p95, %p96
      %s98 = ssub.s32 %s24, %s43
      %s99 = ssub.s32 %s26, %s35
      %s100 = sor.u32 %s98, %s99
      %s101 = ssub.s32 %s25, %s39
      %s102 = sor.u32 %s100, %s101
      %p103 = scmp.eq.s32.totalorder %s102, 0
      %s105 = sadd.s32 %s104, 1
      %s106 = scalar_select %p103, %s104, %s105
      %p109 = pneg %p103
      %p110 = scmp.eq.s32.totalorder %s17, 7
      %p111 = por %p109, %p110
      %p112 = scmp.ne.s32.totalorder %s104, %s107
      %p113 = scmp.eq.s32.totalorder %s17, 0
      %p114 = por %p112, %p113
      %p115 = scmp.ne.s32.totalorder %s104, %s107
      %p116 = scmp.eq.s32.totalorder %s22, 7
      %p117 = por %p115, %p116
      %p118 = scmp.ne.s32.totalorder %s107, %s108
      %p119 = scmp.eq.s32.totalorder %s22, 0
      %p120 = por %p118, %p119
      %p121 = scmp.ne.s32.totalorder %s107, %s108
      %p122 = scmp.eq.s32.totalorder %s23, 7
      %p123 = por %p121, %p122
      %p125 = scmp.ne.s32.totalorder %s108, %s124
      %p126 = scmp.eq.s32.totalorder %s23, 0
      %p127 = por %p125, %p126
      %s128 = ssub.s32 %s24, %s43
      %s129 = ssub.s32 %s26, %s35
      %s130 = sor.u32 %s128, %s129
      %s131 = ssub.s32 %s25, %s39
      %s132 = sor.u32 %s130, %s131
      %p133 = scmp.eq.s32.totalorder %s132, 0
      %s135 = sadd.s32 %s134, 1
      %s136 = scalar_select %p133, %s134, %s135
      %p139 = pneg %p133
      %p140 = scmp.eq.s32.totalorder %s17, 7
      %p141 = por %p139, %p140
      %p142 = scmp.ne.s32.totalorder %s134, %s137
      %p143 = scmp.eq.s32.totalorder %s17, 0
      %p144 = por %p142, %p143
      %p145 = scmp.ne.s32.totalorder %s134, %s137
      %p146 = scmp.eq.s32.totalorder %s22, 7
      %p147 = por %p145, %p146
      %p148 = scmp.ne.s32.totalorder %s137, %s138
      %p149 = scmp.eq.s32.totalorder %s22, 0
      %p150 = por %p148, %p149
      %p151 = scmp.ne.s32.totalorder %s137, %s138
      %p152 = scmp.eq.s32.totalorder %s23, 7
      %p153 = por %p151, %p152
      %p155 = scmp.ne.s32.totalorder %s138, %s154
      %p156 = scmp.eq.s32.totalorder %s23, 0
      %p157 = por %p155, %p156
      %s158 = ssub.s32 %s24, %s43
      %s159 = ssub.s32 %s26, %s35
      %s160 = sor.u32 %s158, %s159
      %s161 = ssub.s32 %s25, %s39
      %s162 = sor.u32 %s160, %s161
      %p163 = scmp.eq.s32.totalorder %s162, 0
      %s165 = sadd.s32 %s164, 1
      %s166 = scalar_select %p163, %s164, %s165
      %p169 = pneg %p163
      %p170 = scmp.eq.s32.totalorder %s17, 7
      %p171 = por %p169, %p170
      %p172 = scmp.ne.s32.totalorder %s164, %s167
      %p173 = scmp.eq.s32.totalorder %s17, 0
      %p174 = por %p172, %p173
      %p175 = scmp.ne.s32.totalorder %s164, %s167
      %p176 = scmp.eq.s32.totalorder %s22, 7
      %p177 = por %p175, %p176
      %p178 = scmp.ne.s32.totalorder %s167, %s168
      %p179 = scmp.eq.s32.totalorder %s22, 0
      %p180 = por %p178, %p179
      %p181 = scmp.ne.s32.totalorder %s167, %s168
      %p182 = scmp.eq.s32.totalorder %s23, 7
      %p183 = por %p181, %p182
      %p185 = scmp.ne.s32.totalorder %s168, %s184
      %p186 = scmp.eq.s32.totalorder %s23, 0
      %p187 = por %p185, %p186
      %p188 = scmp.le.s32.totalorder 1, %s17
      %p189 = scmp.lt.s32.totalorder %s17, 9
      %p190 = pnand %p188, %p189
      %p191 = pneg %p190
      // Predicated region
      $region9: #{tpu_custom_call.1} parent=5 // pred_check
        _
      $region10: #{tpu_custom_call.1} parent=5 // pred_check_branch
        %193 = sbr.rel (%p190) target = $region12
      $region11: #{tpu_custom_call.1} parent=5 // pred_region
        %s194 = ssub.s32 %s17, 1
      $region12: #{tpu_custom_call.1} parent=5 // pred_fallthru
        _
      %p195 = scmp.lt.s32.totalorder %s17, 8
      // Predicated region
      $region13: #{tpu_custom_call.1} parent=5 // pred_check
        %p196 = pneg %p195
      $region14: #{tpu_custom_call.1} parent=5 // pred_check_branch
        %198 = sbr.rel (%p196) target = $region16
      $region15: #{tpu_custom_call.1} parent=5 // pred_region
        // Predicated region
        $region17: #{tpu_custom_call.1} parent=15 // pred_check
          %p199 = pneg %p58
        $region18: #{tpu_custom_call.1} parent=15 // pred_check_branch
          %201 = sbr.rel (%p199) target = $region20
        $region19: #{tpu_custom_call.1} parent=15 // pred_region
          %p202 = scmp.lt.s32.totalorder %s24, 1
          %s203 = scalar_select %p202, %s24, 1
          %p204 = scmp.lt.s32.totalorder %s25, 0
          %s205 = scalar_select %p204, %s25, 0
          %s206 = sadd.s32 %s205, %s203
          %s207 = smul.addr %s206, 4
          %s208 = scalar_lea.vmem %s0, %s207
        $region20: #{tpu_custom_call.1} parent=15 // pred_fallthru
          _
        // Predicated region
        $region21: #{tpu_custom_call.1} parent=15 // pred_check
          %p209 = pneg %p84
        $region22: #{tpu_custom_call.1} parent=15 // pred_check_branch
          %211 = sbr.rel (%p209) target = $region24
        $region23: #{tpu_custom_call.1} parent=15 // pred_region
          %p212 = scmp.lt.s32.totalorder %s26, 3
          %s213 = scalar_select %p212, %s26, 3
          %s214 = smul.addr %s213, 4
          %s215 = smul.addr %s214, 4
          %s216 = scalar_lea.vmem %s1, %s215
        $region24: #{tpu_custom_call.1} parent=15 // pred_fallthru
          _
      $region16: #{tpu_custom_call.1} parent=5 // pred_fallthru
        _
      %p217 = scmp.le.s32.totalorder 1, %s17
      %p218 = scmp.lt.s32.totalorder %s17, 9
      %p219 = pnand %p217, %p218
      %p220 = pneg %p219
      // Predicated region
      $region25: #{tpu_custom_call.1} parent=5 // pred_check
        _
      $region26: #{tpu_custom_call.1} parent=5 // pred_check_branch
        %222 = sbr.rel (%p219) target = $region28
      $region27: #{tpu_custom_call.1} parent=5 // pred_region
        %s223 = ssub.s32 %s17, 1
        %p224 = scmp.lt.s32.totalorder %s27, 1
        %s225 = scalar_select %p224, %s27, 1
        %p226 = scmp.lt.s32.totalorder %s28, 0
        %s227 = scalar_select %p226, %s28, 0
        %s228 = sadd.s32 %s227, %s225
        %s229 = smul.addr %s228, 4
        %s230 = scalar_lea.vmem %s0, %s229
        %p231 = pneg %p64
        %p232 = pneg %p61
        %p233 = scmp.lt.s32.totalorder %s29, 3
        %s234 = scalar_select %p233, %s29, 3
        %s235 = smul.addr %s234, 4
        %s236 = smul.addr %s235, 4
        %s237 = scalar_lea.vmem %s1, %s236
        %p238 = pneg %p90
        %p239 = pneg %p87
        %p240 = pneg %p120
        %p241 = pneg %p117
        %s242 = sand.u32 %s107, 1
        %s243 = scalar_lea.sflag [#allocation3], %s242
        %s244 = sand.u32 %s107, 1
        %s245 = smul.addr %s244, 4
        %s246 = scalar_lea.vmem [#allocation2], %s245
        %p247 = pneg %p150
        %p248 = pneg %p147
        %s249 = sand.u32 %s22, 1
        %s250 = scalar_lea.sflag [#allocation5], %s249
        %s251 = sand.u32 %s137, 1
        %s252 = smul.addr %s251, 4
        %s253 = scalar_lea.vmem [#allocation4], %s252
        %p254 = pneg %p180
        %p255 = pneg %p177
        %s256 = sand.u32 %s22, 1
        %s257 = scalar_lea.sflag [#allocation5], %s256
        %s258 = sand.u32 %s167, 1
        %s259 = smul.addr %s258, 4
        %s260 = scalar_lea.vmem [#allocation6], %s259
        %p261 = scmp.lt.s32.totalorder %s27, 1
        %s262 = scalar_select %p261, %s27, 1
        %p263 = scmp.lt.s32.totalorder %s28, 0
        %s264 = scalar_select %p263, %s28, 0
        %s265 = sadd.s32 %s264, %s262
        %s266 = smul.addr %s265, 4
        %s267 = scalar_lea.vmem %s0, %s266
        %p268 = scmp.lt.s32.totalorder %s29, 3
        %s269 = scalar_select %p268, %s29, 3
        %s270 = smul.addr %s269, 4
        %s271 = smul.addr %s270, 4
        %s272 = scalar_lea.vmem %s1, %s271
        %v274 = vld [vmem:[%s267] sm:$0xf]
        %v275 = vld [vmem:[%s272] sm:$0xf]
        %v276 = vld [vmem:[%s272 + $0x4] sm:$0xf]
        %v277 = vld [vmem:[%s272 + $0x8] sm:$0xf]
        %v278 = vld [vmem:[%s272 + $0xc] sm:$0xf]
        %v283 = vunpack.c.l.b16 %v275
        %v284 = vunpack.c.l.b16 %v276
        %v285 = vunpack.c.l.b16 %v277
        %v286 = vunpack.c.l.b16 %v278
        %v287 = vpack.c.b16 %v284, %v283
        %v288 = vpack.c.b16 %v286, %v285
        %vm291 = vcmask 261120
        %v293 = vsel %vm291, %v274, 0
        %295 = vmatprep.subr.bf16.mxu0 0
        %296 = vmatpush1.bf16.msra.mxu0 %v287
        %297 = vmatprep.subr.bf16.mxu0 0
        %298 = vmatpush1.bf16.msra.mxu0 %v288
        %299 = vmatprep.subr.bf16.mxu0 0
        %300 = vmatpush1.bf16.msra.mxu0 0
        %301 = vmatprep.subr.bf16.mxu0 0
        %302 = vmatpush1.bf16.msra.mxu0 0
        %303 = vmatprep.subr.bf16.mxu0 0
        %304 = vmatpush1.bf16.msra.mxu0 0
        %305 = vmatprep.subr.bf16.mxu0 0
        %306 = vmatpush1.bf16.msra.mxu0 0
        %307 = vmatprep.subr.bf16.mxu0 0
        %308 = vmatpush1.bf16.msra.mxu0 0
        %309 = vmatprep.subr.bf16.mxu0 0
        %310 = vmatpush1.bf16.msra.mxu0 0
        %311 = vmatprep.subr.bf16.mxu0 0
        %312 = vmatpush1.bf16.msra.mxu0 0
        %313 = vmatprep.subr.bf16.mxu0 0
        %314 = vmatpush1.bf16.msra.mxu0 0
        %315 = vmatprep.subr.bf16.mxu0 0
        %316 = vmatpush1.bf16.msra.mxu0 0
        %317 = vmatprep.subr.bf16.mxu0 0
        %318 = vmatpush1.bf16.msra.mxu0 0
        %319 = vmatprep.subr.bf16.mxu0 0
        %320 = vmatpush1.bf16.msra.mxu0 0
        %321 = vmatprep.subr.bf16.mxu0 0
        %322 = vmatpush1.bf16.msra.mxu0 0
        %323 = vmatprep.subr.bf16.mxu0 0
        %324 = vmatpush1.bf16.msra.mxu0 0
        %325 = vmatprep.subr.bf16.mxu0 0
        %326 = vmatpush1.bf16.msra.mxu0 0
        %327 = vmatprep.mubr.bf16.mxu0 0
        %328 = vmatmul.mubr.bf16.gmra.mrb[0].mxu0 %v293
        %v329 = vpop.f32.mrb[0].mxu0
        %v330 = vadd.f32 0.0, %v329
        %v331 = vpop.f32.mrb[0].mxu0
        %v332 = vpop.f32.mrb[0].mxu0
        %v333 = vpop.f32.mrb[0].mxu0
        %334 = vdwg.mxu0
        %v335 = vpack.c.bf16 %v330, %v330
        %vm336 = vcmask 60416
        %337 = vst.msk [vmem:[%s246] sm:$0xf] %vm336, %v335
        %v339 = vunpack.c.l.b16 %v335
        %v340 = vpack.c.b16 %v339, %v339
        %341 = vrot.lane.b32.xlu0 %v340, 120
        %v342 = vpop.permute.xlu0 %341
        %344 = vst.msk [vmem:[%s253] sm:$0xf] %vm336, %v342
        %345 = vrot.lane.b32.xlu0 %v340, 112
        %v346 = vpop.permute.xlu0 %345
        %348 = vst.msk [vmem:[%s260] sm:$0xf] %vm336, %v346
        %s349 = sand.u32 %s107, 1
        %s350 = scalar_lea.sflag [#allocation3], %s349
        %s351 = sand.u32 %s107, 1
        %s352 = smul.addr %s351, 4
        %s353 = scalar_lea.vmem [#allocation2], %s352
        %s354 = sand.u32 %s22, 1
        %s355 = scalar_lea.sflag [#allocation5], %s354
        %s356 = sand.u32 %s137, 1
        %s357 = smul.addr %s356, 4
        %s358 = scalar_lea.vmem [#allocation4], %s357
        %s359 = sand.u32 %s22, 1
        %s360 = scalar_lea.sflag [#allocation5], %s359
        %s361 = sand.u32 %s167, 1
        %s362 = smul.addr %s361, 4
        %s363 = scalar_lea.vmem [#allocation6], %s362
        // Predicated region
        $region29: #{tpu_custom_call.1} parent=27 // pred_check
          %p364 = pneg %p117
        $region30: #{tpu_custom_call.1} parent=27 // pred_check_branch
          %366 = sbr.rel (%p364) target = $region32
        $region31: #{tpu_custom_call.1} parent=27 // pred_region
          %s368 = ssub.s32 64, 64
          %369 = vsyncadd %s350, %s368
          %s370 = sadd.s32 %s28, %s29
          %s371 = smul.addr %s27, 4
          %s372 = sadd.s32 %s370, %s371
          %s373 = smul.addr %s372, 64
          %s374 = scalar_lea.hbm %s2, %s373
          %s376 = sshll.u32 %s353, 4
          %s377 = int_to_ptr.vmem [resolvable:$true] %s376
          %379 = dma.vmem_to_hbm [thread:$0]  %s377, 64, %s374, %s350
        $region32: #{tpu_custom_call.1} parent=27 // pred_fallthru
          _
        // Predicated region
        $region33: #{tpu_custom_call.1} parent=27 // pred_check
          %p380 = pneg %p147
        $region34: #{tpu_custom_call.1} parent=27 // pred_check_branch
          %382 = sbr.rel (%p380) target = $region36
        $region35: #{tpu_custom_call.1} parent=27 // pred_region
          %s384 = ssub.s32 64, 64
          %385 = vsyncadd %s355, %s384
          %s386 = sadd.s32 %s28, %s29
          %s387 = smul.addr %s27, 4
          %s388 = sadd.s32 %s386, %s387
          %s389 = smul.addr %s388, 64
          %s390 = scalar_lea.hbm %s3, %s389
          %s392 = sshll.u32 %s358, 4
          %s393 = int_to_ptr.vmem [resolvable:$true] %s392
          %395 = dma.vmem_to_hbm [thread:$0]  %s393, 64, %s390, %s355
        $region36: #{tpu_custom_call.1} parent=27 // pred_fallthru
          _
        // Predicated region
        $region37: #{tpu_custom_call.1} parent=27 // pred_check
          %p396 = pneg %p177
        $region38: #{tpu_custom_call.1} parent=27 // pred_check_branch
          %398 = sbr.rel (%p396) target = $region40
        $region39: #{tpu_custom_call.1} parent=27 // pred_region
          %s400 = ssub.s32 64, 64
          %401 = vsyncadd %s360, %s400
          %s402 = sadd.s32 %s28, %s29
          %s403 = smul.addr %s27, 4
          %s404 = sadd.s32 %s402, %s403
          %s405 = smul.addr %s404, 64
          %s406 = scalar_lea.hbm %s4, %s405
          %s408 = sshll.u32 %s363, 4
          %s409 = int_to_ptr.vmem [resolvable:$true] %s408
          %411 = dma.vmem_to_hbm [thread:$0]  %s409, 64, %s406, %s360
        $region40: #{tpu_custom_call.1} parent=27 // pred_fallthru
          _
      $region28: #{tpu_custom_call.1} parent=5 // pred_fallthru
        _
      %p412 = scmp.le.s32.totalorder 2, %s17
      // Predicated region
      $region41: #{tpu_custom_call.1} parent=5 // pred_check
        %p413 = pneg %p412
      $region42: #{tpu_custom_call.1} parent=5 // pred_check_branch
        %415 = sbr.rel (%p413) target = $region44
      $region43: #{tpu_custom_call.1} parent=5 // pred_region
        %s416 = ssub.s32 %s17, 2
        // Predicated region
        $region45: #{tpu_custom_call.1} parent=43 // pred_check
          %p417 = pneg %p123
        $region46: #{tpu_custom_call.1} parent=43 // pred_check_branch
          %419 = sbr.rel (%p417) target = $region48
        $region47: #{tpu_custom_call.1} parent=43 // pred_region
          %s420 = sand.u32 %s108, 1
          %s421 = scalar_lea.sflag [#allocation3], %s420
          %s422 = sand.u32 %s108, 1
          %s423 = smul.addr %s422, 4
          %s424 = scalar_lea.vmem [#allocation2], %s423
          %425 = dma.done %s421, 64
        $region48: #{tpu_custom_call.1} parent=43 // pred_fallthru
          _
        // Predicated region
        $region49: #{tpu_custom_call.1} parent=43 // pred_check
          %p426 = pneg %p153
        $region50: #{tpu_custom_call.1} parent=43 // pred_check_branch
          %428 = sbr.rel (%p426) target = $region52
        $region51: #{tpu_custom_call.1} parent=43 // pred_region
          %s429 = sand.u32 %s23, 1
          %s430 = scalar_lea.sflag [#allocation5], %s429
          %s431 = sand.u32 %s138, 1
          %s432 = smul.addr %s431, 4
          %s433 = scalar_lea.vmem [#allocation4], %s432
          %434 = dma.done %s430, 64
        $region52: #{tpu_custom_call.1} parent=43 // pred_fallthru
          _
        // Predicated region
        $region53: #{tpu_custom_call.1} parent=43 // pred_check
          %p435 = pneg %p183
        $region54: #{tpu_custom_call.1} parent=43 // pred_check_branch
          %437 = sbr.rel (%p435) target = $region56
        $region55: #{tpu_custom_call.1} parent=43 // pred_region
          %s438 = sand.u32 %s23, 1
          %s439 = scalar_lea.sflag [#allocation5], %s438
          %s440 = sand.u32 %s168, 1
          %s441 = smul.addr %s440, 4
          %s442 = scalar_lea.vmem [#allocation6], %s441
          %443 = dma.done %s439, 64
        $region56: #{tpu_custom_call.1} parent=43 // pred_fallthru
          _
      $region44: #{tpu_custom_call.1} parent=5 // pred_fallthru
        _
    $region6: #{tpu_custom_call.1} parent=1 // loop_footer
      %s21 = sadd.s32 1, %s17
    $region7: #{tpu_custom_call.1} parent=1 // loop_footer_branch
      %16 = sbr.rel target = $region3
    $region8: #{tpu_custom_call.1} parent=1 // loop_exit
      _
    %444 = vsyncpa [#allocation3], 1
    %s445 = scalar_lea.sflag [#allocation3], 1
    %446 = vsyncpa %s445, 1
    %447 = vsyncpa [#allocation5], 1
    %s448 = scalar_lea.sflag [#allocation5], 1
    %449 = vsyncpa %s448, 1

</llo_original>
